<compile_context>
chip_gen: v7x
topology: tpu7x:2x2x1
jax: 0.10.0
libtpu: 0.0.40
codegen_flags: <defaults>
</compile_context>

<pallas_src>
import functools

import jax
import jax.numpy as jnp
import numpy as np
from jax.experimental import pallas as pl
from jax.experimental.pallas import tpu as pltpu


# ---------------------------------------------------------------------------
# Pass 1: per-(n, c) sum and sum-of-squares over the (unpadded) spatial axis.
# ---------------------------------------------------------------------------
def _stats_kernel(x_ref, s1_ref, s2_ref, *, L, tL, tiles_per_split, ragged):
    # x_ref: (C, tL) tile; s1_ref / s2_ref: (C, 1) f32, resident across the
    # last ("arbitrary") L-tile axis, so they act as accumulators.
    l = pl.program_id(2)

    @pl.when(l == 0)
    def _():
        s1_ref[...] = jnp.zeros_like(s1_ref)
        s2_ref[...] = jnp.zeros_like(s2_ref)

    x = x_ref[...].astype(jnp.float32)                     # per-tile upcast
    if ragged:
        # Mask the clipped (garbage-filled) tail of the last L tile so it
        # contributes nothing to the sums.  `ragged` is static, so this code
        # disappears entirely when L is a multiple of tL.
        g = pl.program_id(1) * tiles_per_split + l         # global L-tile idx
        rem = L - g * tL                                    # valid lanes here
        lane = jax.lax.broadcasted_iota(jnp.int32, x.shape, 1)
        x = jnp.where(lane < rem, x, 0.0)

    s1_ref[...] += jnp.sum(x, axis=-1, keepdims=True)
    s2_ref[...] += jnp.sum(x * x, axis=-1, keepdims=True)


# ---------------------------------------------------------------------------
# Pass 2: fused GN+BN+affine as a single per-(n, c) scale/shift (one FMA).
# ---------------------------------------------------------------------------
def _apply_kernel(x_ref, a_ref, b_ref, o_ref):
    # x_ref/o_ref: (C, tL); a_ref / b_ref: (C, 1) f32.
    x = x_ref[...].astype(jnp.float32)
    o_ref[...] = (a_ref[...] * x + b_ref[...]).astype(o_ref.dtype)


def plain_cn_forward(x_nchw, weight, bias, *, num_groups=8, eps=1e-5,
                     max_block_bytes=None):
    """x_nchw: (N, C, H, W); weight, bias: (C,). Returns (N, C, H, W)."""
    N, C, H, W = x_nchw.shape
    G = num_groups
    assert C % G == 0
    Cg = C // G
    L = H * W
    x = x_nchw.reshape(N, C, L)
    itemsize = int(jnp.dtype(x_nchw.dtype).itemsize)

    # --- per-generation VMEM / block budgets --------------------------------
    try:
        vmem_cap = int(pltpu.get_tpu_info().vmem_capacity_bytes)
    except Exception:
        vmem_cap = 64 << 20                                 # conservative (v7x)
    if vmem_cap >= (100 << 20):                             # v5e / v6e: 128 MiB
        default_block_bytes = 8 << 20
        vmem_limit_cap = 64 << 20
    else:                                                   # v7x: 64 MiB / TC
        default_block_bytes = 4 << 20
        vmem_limit_cap = 48 << 20
    if max_block_bytes is None:
        max_block_bytes = default_block_bytes

    # --- lane-dense tiling of the flattened spatial axis (no HBM padding) ---
    max_tl = max(128, (max_block_bytes // (C * itemsize)) // 128 * 128)
    tL = int(min(pl.cdiv(L, 128) * 128, max_tl))            # multiple of 128
    n_lt = int(pl.cdiv(L, tL))
    ragged = (L % tL) != 0

    # Megacore friendliness for the stats pass: if the batch axis alone cannot
    # balance two TensorCores, split the L-tile range in two "parallel" halves
    # and sum the per-half partials in the tiny JAX fold below.
    n_split = 2 if (N % 2 == 1 and n_lt >= 2 and n_lt % 2 == 0) else 1
    tps = n_lt // n_split

    blk_in = C * tL * itemsize
    vmem_limit = int(min(vmem_limit_cap, max(32 << 20, 6 * blk_in + (16 << 20))))

    # --- pass 1: per-(n, c) sum / sumsq -------------------------------------
    stats_kernel = functools.partial(
        _stats_kernel, L=L, tL=tL, tiles_per_split=tps, ragged=ragged)

    s1, s2 = pl.pallas_call(
        stats_kernel,
        out_shape=(jax.ShapeDtypeStruct((N, n_split, C, 1), jnp.float32),
                   jax.ShapeDtypeStruct((N, n_split, C, 1), jnp.float32)),
        grid=(N, n_split, tps),
        in_specs=[pl.BlockSpec((None, C, tL),
                               lambda n, s, l: (n, 0, s * tps + l))],
        out_specs=(pl.BlockSpec((None, None, C, 1), lambda n, s, l: (n, s, 0, 0)),
                   pl.BlockSpec((None, None, C, 1), lambda n, s, l: (n, s, 0, 0))),
        compiler_params=pltpu.CompilerParams(
            dimension_semantics=("parallel", "parallel", "arbitrary"),
            vmem_limit_bytes=vmem_limit),
    )(x)

    # --- tiny (N, C) analytic fold of GN + BN + affine ----------------------
    s1 = s1.sum(axis=1)[..., 0]                             # (N, C) f32
    s2 = s2.sum(axis=1)[..., 0]

    # GroupNorm stats: per (n, g) over Cg * L elements, correction=0.
    cnt_g = float(Cg * L)
    s1g = s1.reshape(N, G, Cg).sum(-1)
    s2g = s2.reshape(N, G, Cg).sum(-1)
    mu_g = s1g / cnt_g
    var_g = jnp.maximum(s2g / cnt_g - mu_g * mu_g, 0.0)
    inv_g = jax.lax.rsqrt(var_g + eps)                      # gn = alpha*x + beta
    alpha = jnp.repeat(inv_g, Cg, axis=1)                   # (N, C)
    beta = jnp.repeat(-mu_g * inv_g, Cg, axis=1)

    # BatchNorm (training) stats of gn per channel over (N, L), derived
    # analytically from the per-(n, c) sums of x.
    cnt_b = float(N * L)
    sum_gn = jnp.sum(alpha * s1 + beta * L, axis=0)                              # (C,)
    sum_gn2 = jnp.sum(alpha * alpha * s2 + 2.0 * alpha * beta * s1
                      + beta * beta * L, axis=0)                                 # (C,)
    mu_b = sum_gn / cnt_b
    var_b = jnp.maximum(sum_gn2 / cnt_b - mu_b * mu_b, 0.0)
    inv_b = jax.lax.rsqrt(var_b + eps)

    w = weight.astype(jnp.float32)
    bb = bias.astype(jnp.float32)
    scale_c = w * inv_b                                                          # (C,)
    a_nc = (scale_c[None, :] * alpha)[:, :, None]                                # (N, C, 1)
    b_nc = (scale_c[None, :] * (beta - mu_b[None, :]) + bb[None, :])[:, :, None]

    # --- pass 2: out = a[n,c] * x + b[n,c] -----------------------------------
    # out_shape is exactly (N, C, L): the ragged last tile's writes are clipped
    # by Pallas, so no padded temp and no final slice.
    out = pl.pallas_call(
        _apply_kernel,
        out_shape=jax.ShapeDtypeStruct((N, C, L), x_nchw.dtype),
        grid=(N, n_lt),
        in_specs=[pl.BlockSpec((None, C, tL), lambda n, l: (n, 0, l)),
                  pl.BlockSpec((None, C, 1), lambda n, l: (n, 0, 0)),
                  pl.BlockSpec((None, C, 1), lambda n, l: (n, 0, 0))],
        out_specs=pl.BlockSpec((None, C, tL), lambda n, l: (n, 0, l)),
        compiler_params=pltpu.CompilerParams(
            dimension_semantics=("parallel", "parallel"),
            vmem_limit_bytes=vmem_limit),
    )(x, a_nc, b_nc)

    return out.reshape(N, C, H, W)


def _reference(x, weight, bias, *, num_groups, eps):
    # Pure-JAX reference mirroring the PyTorch module (training mode).
    N, C, H, W = x.shape
    xg = x.reshape(N, num_groups, -1).astype(jnp.float32)
    gm = jnp.mean(xg, axis=-1, keepdims=True)
    gv = jnp.mean((xg - gm) ** 2, axis=-1, keepdims=True)
    gn = ((xg - gm) / jnp.sqrt(gv + eps)).reshape(N, C, H, W)
    bm = jnp.mean(gn, axis=(0, 2, 3), keepdims=True)
    bv = jnp.mean((gn - bm) ** 2, axis=(0, 2, 3), keepdims=True)
    bn = (gn - bm) / jnp.sqrt(bv + eps)
    return weight.reshape(1, C, 1, 1) * bn + bias.reshape(1, C, 1, 1)


if __name__ == "__main__":
    EPS = 1e-5
    key = jax.random.PRNGKey(0)

    configs = [
        # (N, C, H, W, G, max_block_bytes override)
        (2, 32, 16, 16, 8, None),            # lane-aligned L, batch-parallel
        (1, 16, 9, 9, 4, None),              # ragged single tile (L=81 < 128)
        (1, 16, 30, 30, 4, 16 * 256 * 4),    # multi-tile + ragged + L-split
    ]
    for (N, C, H, W, G, mbb) in configs:
        kx, kw, kb, key = jax.random.split(key, 4)
        x = jax.random.normal(kx, (N, C, H, W), dtype=jnp.float32)
        # PyTorch default BN affine is weight=1, bias=0; perturb to exercise it.
        weight = 1.0 + 0.1 * jax.random.normal(kw, (C,), dtype=jnp.float32)
        bias = 0.1 * jax.random.normal(kb, (C,), dtype=jnp.float32)

        out = plain_cn_forward(x, weight, bias, num_groups=G, eps=EPS,
                               max_block_bytes=mbb)
        out = jax.block_until_ready(out)

        ref = _reference(x, weight, bias, num_groups=G, eps=EPS)
        np.testing.assert_allclose(np.asarray(out), np.asarray(ref),
                                   atol=1e-4, rtol=1e-4)

    print("KERNEL_OK")
</pallas_src>

<mosaic_0001>
module attributes {stable_mosaic.version = 11 : i64} {
  func.func @_stats_kernel(%arg0: i32, %arg1: i32, %arg2: i32, %arg3: memref<1x32x256xf32, #tpu.memory_space<vmem>>, %arg4: memref<1x1x32x1xf32, #tpu.memory_space<vmem>>, %arg5: memref<1x1x32x1xf32, #tpu.memory_space<vmem>>) attributes {dimension_semantics = [#tpu.dimension_semantics<parallel>, #tpu.dimension_semantics<parallel>, #tpu.dimension_semantics<arbitrary>], iteration_bounds = array<i64: 2, 1, 1>, scalar_prefetch = 0 : i64, scratch_operands = 0 : i64, tpu.core_type = #tpu.core_type<tc>, window_params = [{transform_indices = @transform_0, window_bounds = array<i64: 1, 32, 256>}, {transform_indices = @transform_1, window_bounds = array<i64: 1, 1, 32, 1>}, {transform_indices = @transform_2, window_bounds = array<i64: 1, 1, 32, 1>}]} {
    %c0_i32 = arith.constant 0 : i32
    %0 = arith.cmpi eq, %arg2, %c0_i32 : i32
    %1 = arith.extui %0 : i1 to i32
    %c0_i32_0 = arith.constant 0 : i32
    %2 = arith.cmpi ne, %1, %c0_i32_0 : i32
    scf.if %2 {
      %cst_20 = arith.constant 0.000000e+00 : f32
      %22 = vector.broadcast %cst_20 : f32 to vector<32x1xf32>
      %c0_21 = arith.constant 0 : index
      %c0_22 = arith.constant 0 : index
      %c0_23 = arith.constant 0 : index
      %c0_24 = arith.constant 0 : index
      %23 = vector.load %arg4[%c0_21, %c0_22, %c0_23, %c0_24] : memref<1x1x32x1xf32, #tpu.memory_space<vmem>>, vector<1x1x32x1xf32>
      %24 = vector.shape_cast %23 : vector<1x1x32x1xf32> to vector<32x1xf32>
      %25 = vector.shape_cast %22 : vector<32x1xf32> to vector<1x1x32x1xf32>
      tpu.vector_store %arg4[%c0_21, %c0_22, %c0_23, %c0_24], %25 {strides = array<i32>} : memref<1x1x32x1xf32, #tpu.memory_space<vmem>>, vector<1x1x32x1xf32>,
      %cst_25 = arith.constant 0.000000e+00 : f32
      %26 = vector.broadcast %cst_25 : f32 to vector<32x1xf32>
      %c0_26 = arith.constant 0 : index
      %c0_27 = arith.constant 0 : index
      %c0_28 = arith.constant 0 : index
      %c0_29 = arith.constant 0 : index
      %27 = vector.load %arg5[%c0_26, %c0_27, %c0_28, %c0_29] : memref<1x1x32x1xf32, #tpu.memory_space<vmem>>, vector<1x1x32x1xf32>
      %28 = vector.shape_cast %27 : vector<1x1x32x1xf32> to vector<32x1xf32>
      %29 = vector.shape_cast %26 : vector<32x1xf32> to vector<1x1x32x1xf32>
      tpu.vector_store %arg5[%c0_26, %c0_27, %c0_28, %c0_29], %29 {strides = array<i32>} : memref<1x1x32x1xf32, #tpu.memory_space<vmem>>, vector<1x1x32x1xf32>,
    } else {
    }
    %c0 = arith.constant 0 : index
    %c0_1 = arith.constant 0 : index
    %c0_2 = arith.constant 0 : index
    %3 = vector.load %arg3[%c0, %c0_1, %c0_2] : memref<1x32x256xf32, #tpu.memory_space<vmem>>, vector<1x32x256xf32>
    %4 = vector.shape_cast %3 : vector<1x32x256xf32> to vector<32x256xf32>
    %c0_3 = arith.constant 0 : index
    %c0_4 = arith.constant 0 : index
    %c0_5 = arith.constant 0 : index
    %c0_6 = arith.constant 0 : index
    %5 = vector.load %arg4[%c0_3, %c0_4, %c0_5, %c0_6] : memref<1x1x32x1xf32, #tpu.memory_space<vmem>>, vector<1x1x32x1xf32>
    %6 = vector.shape_cast %5 : vector<1x1x32x1xf32> to vector<32x1xf32>
    %cst = arith.constant dense<0.000000e+00> : vector<32xf32>
    %7 = vector.multi_reduction <add>, %4, %cst [1] : vector<32x256xf32> to vector<32xf32>
    %8 = vector.shape_cast %7 : vector<32xf32> to vector<32x1xf32>
    %9 = arith.addf %6, %8 : vector<32x1xf32>
    %c0_7 = arith.constant 0 : index
    %c0_8 = arith.constant 0 : index
    %c0_9 = arith.constant 0 : index
    %c0_10 = arith.constant 0 : index
    %10 = vector.load %arg4[%c0_7, %c0_8, %c0_9, %c0_10] : memref<1x1x32x1xf32, #tpu.memory_space<vmem>>, vector<1x1x32x1xf32>
    %11 = vector.shape_cast %10 : vector<1x1x32x1xf32> to vector<32x1xf32>
    %12 = vector.shape_cast %9 : vector<32x1xf32> to vector<1x1x32x1xf32>
    tpu.vector_store %arg4[%c0_7, %c0_8, %c0_9, %c0_10], %12 {strides = array<i32>} : memref<1x1x32x1xf32, #tpu.memory_space<vmem>>, vector<1x1x32x1xf32>,
    %c0_11 = arith.constant 0 : index
    %c0_12 = arith.constant 0 : index
    %c0_13 = arith.constant 0 : index
    %c0_14 = arith.constant 0 : index
    %13 = vector.load %arg5[%c0_11, %c0_12, %c0_13, %c0_14] : memref<1x1x32x1xf32, #tpu.memory_space<vmem>>, vector<1x1x32x1xf32>
    %14 = vector.shape_cast %13 : vector<1x1x32x1xf32> to vector<32x1xf32>
    %15 = arith.mulf %4, %4 : vector<32x256xf32>
    %cst_15 = arith.constant dense<0.000000e+00> : vector<32xf32>
    %16 = vector.multi_reduction <add>, %15, %cst_15 [1] : vector<32x256xf32> to vector<32xf32>
    %17 = vector.shape_cast %16 : vector<32xf32> to vector<32x1xf32>
    %18 = arith.addf %14, %17 : vector<32x1xf32>
    %c0_16 = arith.constant 0 : index
    %c0_17 = arith.constant 0 : index
    %c0_18 = arith.constant 0 : index
    %c0_19 = arith.constant 0 : index
    %19 = vector.load %arg5[%c0_16, %c0_17, %c0_18, %c0_19] : memref<1x1x32x1xf32, #tpu.memory_space<vmem>>, vector<1x1x32x1xf32>
    %20 = vector.shape_cast %19 : vector<1x1x32x1xf32> to vector<32x1xf32>
    %21 = vector.shape_cast %18 : vector<32x1xf32> to vector<1x1x32x1xf32>
    tpu.vector_store %arg5[%c0_16, %c0_17, %c0_18, %c0_19], %21 {strides = array<i32>} : memref<1x1x32x1xf32, #tpu.memory_space<vmem>>, vector<1x1x32x1xf32>,
    return
  }
  func.func @transform_0(%arg0: i32, %arg1: i32, %arg2: i32) -> (i32, i32, i32) {
    %c1_i32 = arith.constant 1 : i32
    %0 = arith.muli %arg1, %c1_i32 : i32
    %1 = arith.addi %0, %arg2 : i32
    %c0_i32 = arith.constant 0 : i32
    %c0_i32_0 = arith.constant 0 : i32
    return %arg0, %c0_i32, %1 : i32, i32, i32
  }
  func.func @transform_1(%arg0: i32, %arg1: i32, %arg2: i32) -> (i32, i32, i32, i32) {
    %c0_i32 = arith.constant 0 : i32
    %c0_i32_0 = arith.constant 0 : i32
    %c0_i32_1 = arith.constant 0 : i32
    return %arg0, %arg1, %c0_i32, %c0_i32_0 : i32, i32, i32, i32
  }
  func.func @transform_2(%arg0: i32, %arg1: i32, %arg2: i32) -> (i32, i32, i32, i32) {
    %c0_i32 = arith.constant 0 : i32
    %c0_i32_0 = arith.constant 0 : i32
    %c0_i32_1 = arith.constant 0 : i32
    return %arg0, %arg1, %c0_i32, %c0_i32_0 : i32, i32, i32, i32
  }
}

</mosaic_0001>

<llo_original>
// kernel: tpu_custom_call.1
$region0: #{tpu_custom_call.1}
  #allocation0 [shape = 'u32[]', space=smem, size = 0x4, offset = 0x4, fixed_abs, tag = 'smem constant byte address 0x4 - core index']
  #allocation1 [shape = 'u32[144,128]{1,0:T(1,128)}', space=vmem, size = 0x12000, scoped, tag = 'internal scratch']
  %s0 = inlined_call_operand.hbm [shape: f32[2,32,256], index: 0, kind: input, shape index: {}]
  %s1 = inlined_call_operand.vmem [shape: f32[2,1,32,1], index: 1, kind: output, shape index: {0}]
  %s2 = inlined_call_operand.vmem [shape: f32[2,1,32,1], index: 2, kind: output, shape index: {1}]
  %3 = xla_tuple %s1, %s2
  %s4 = sld [smem:[#allocation0]]
  $region53: #{tpu_custom_call.1} parent=0
    _
  %s6 = ssub.s32 1, %s4
  %s7 = scalar_select 0, %s6, %s4
  $region1: #{tpu_custom_call.1} parent=0
    #allocation2 [shape = 'u8[65536]{0}', space=vmem, size = 0x10000, scoped, tag = 'input window, operand 0']
    #allocation3 [shape = 's32[2]{0}', space=sflag, size = 0x8, scoped, tag = 'scoped memory for tpu_custom_call.1']
    %8 = vsyncpa [#allocation3], 0
    %s9 = scalar_lea.sflag [#allocation3], 1
    %10 = vsyncpa %s9, 0
    loop: start=0, step=1, limit=4
    $region2: #{tpu_custom_call.1} parent=1 // loop_pre_header
      _
    $region3: #{tpu_custom_call.1} parent=1 // loop_header
      %s12 = sphi 0, %s16
      %p13 = scmp.ge.s32.totalorder %s12, 4
      %s19 = sphi 0, %s38
      %s20 = sphi 0, %s34
      %s21 = sphi 0, %s30
      %s22 = sphi 0, %s19
      %s23 = sphi 0, %s20
      %s24 = sphi 0, %s21
      %s25 = sphi 0, %s22
      %s26 = sphi 0, %s23
      %s27 = sphi 0, %s24
      %s45 = sphi 0, %s47
      %s48 = sphi 0, %s45
      %s49 = sphi 0, %s48
      %s65 = sphi 0, %s49
      %s73 = sphi 0, %s75
      %s76 = sphi 0, %s73
      %s77 = sphi 0, %s76
      %s93 = sphi 0, %s77
      %s101 = sphi 0, %s103
      %s104 = sphi 0, %s101
      %s105 = sphi 0, %s104
      %s121 = sphi 0, %s105
    $region4: #{tpu_custom_call.1} parent=1 // loop_header_branch
      %15 = sbr.rel (%p13) target = $region8
    $region5: #{tpu_custom_call.1} parent=1 // loop_body
      %s17 = ssub.s32 %s12, 1
      %s18 = ssub.s32 %s12, 2
      %s28 = sadd.s32 1, %s21
      %p29 = scmp.ge.s32.totalorder %s28, 1
      %s30 = scalar_select %p29, 0, %s28
      %s31 = sadd.s32 1, %s20
      %s32 = scalar_select %p29, %s31, %s20
      %p33 = scmp.ge.s32.totalorder %s32, 1
      %s34 = scalar_select %p33, 0, %s32
      %s35 = sadd.s32 1, %s19
      %s36 = scalar_select %p33, %s35, %s19
      %p37 = scmp.ge.s32.totalorder %s36, 2
      %s38 = scalar_select %p37, 0, %s36
      %s39 = sadd.s32 %s20, %s21
      %s40 = sadd.s32 %s34, %s30
      %s41 = ssub.s32 %s19, %s38
      %s42 = ssub.s32 %s39, %s40
      %s43 = sor.u32 %s41, %s42
      %p44 = scmp.eq.s32.totalorder %s43, 0
      %s46 = sadd.s32 %s45, 1
      %s47 = scalar_select %p44, %s45, %s46
      %p50 = pneg %p44
      %p51 = scmp.eq.s32.totalorder %s12, 1
      %p52 = por %p50, %p51
      %p53 = scmp.ne.s32.totalorder %s45, %s48
      %p54 = scmp.eq.s32.totalorder %s12, 0
      %p55 = por %p53, %p54
      %p56 = scmp.ne.s32.totalorder %s45, %s48
      %p57 = scmp.eq.s32.totalorder %s17, 1
      %p58 = por %p56, %p57
      %p59 = scmp.ne.s32.totalorder %s48, %s49
      %p60 = scmp.eq.s32.totalorder %s17, 0
      %p61 = por %p59, %p60
      %p62 = scmp.ne.s32.totalorder %s48, %s49
      %p63 = scmp.eq.s32.totalorder %s18, 1
      %p64 = por %p62, %p63
      %p66 = scmp.ne.s32.totalorder %s49, %s65
      %p67 = scmp.eq.s32.totalorder %s18, 0
      %p68 = por %p66, %p67
      %s69 = ssub.s32 %s19, %s38
      %s70 = ssub.s32 %s20, %s34
      %s71 = sor.u32 %s69, %s70
      %p72 = scmp.eq.s32.totalorder %s71, 0
      %s74 = sadd.s32 %s73, 1
      %s75 = scalar_select %p72, %s73, %s74
      %p78 = pneg %p72
      %p79 = scmp.eq.s32.totalorder %s12, 1
      %p80 = por %p78, %p79
      %p81 = scmp.ne.s32.totalorder %s73, %s76
      %p82 = scmp.eq.s32.totalorder %s12, 0
      %p83 = por %p81, %p82
      %p84 = scmp.ne.s32.totalorder %s73, %s76
      %p85 = scmp.eq.s32.totalorder %s17, 1
      %p86 = por %p84, %p85
      %p87 = scmp.ne.s32.totalorder %s76, %s77
      %p88 = scmp.eq.s32.totalorder %s17, 0
      %p89 = por %p87, %p88
      %p90 = scmp.ne.s32.totalorder %s76, %s77
      %p91 = scmp.eq.s32.totalorder %s18, 1
      %p92 = por %p90, %p91
      %p94 = scmp.ne.s32.totalorder %s77, %s93
      %p95 = scmp.eq.s32.totalorder %s18, 0
      %p96 = por %p94, %p95
      %s97 = ssub.s32 %s19, %s38
      %s98 = ssub.s32 %s20, %s34
      %s99 = sor.u32 %s97, %s98
      %p100 = scmp.eq.s32.totalorder %s99, 0
      %s102 = sadd.s32 %s101, 1
      %s103 = scalar_select %p100, %s101, %s102
      %p106 = pneg %p100
      %p107 = scmp.eq.s32.totalorder %s12, 1
      %p108 = por %p106, %p107
      %p109 = scmp.ne.s32.totalorder %s101, %s104
      %p110 = scmp.eq.s32.totalorder %s12, 0
      %p111 = por %p109, %p110
      %p112 = scmp.ne.s32.totalorder %s101, %s104
      %p113 = scmp.eq.s32.totalorder %s17, 1
      %p114 = por %p112, %p113
      %p115 = scmp.ne.s32.totalorder %s104, %s105
      %p116 = scmp.eq.s32.totalorder %s17, 0
      %p117 = por %p115, %p116
      %p118 = scmp.ne.s32.totalorder %s104, %s105
      %p119 = scmp.eq.s32.totalorder %s18, 1
      %p120 = por %p118, %p119
      %p122 = scmp.ne.s32.totalorder %s105, %s121
      %p123 = scmp.eq.s32.totalorder %s18, 0
      %p124 = por %p122, %p123
      %p125 = scmp.le.s32.totalorder 1, %s12
      %p126 = scmp.lt.s32.totalorder %s12, 3
      %p127 = pnand %p125, %p126
      %p128 = pneg %p127
      // Predicated region
      $region9: #{tpu_custom_call.1} parent=5 // pred_check
        _
      $region10: #{tpu_custom_call.1} parent=5 // pred_check_branch
        %130 = sbr.rel (%p127) target = $region12
      $region11: #{tpu_custom_call.1} parent=5 // pred_region
        %s131 = ssub.s32 %s12, 1
      $region12: #{tpu_custom_call.1} parent=5 // pred_fallthru
        _
      %p132 = scmp.lt.s32.totalorder %s12, 2
      // Predicated region
      $region13: #{tpu_custom_call.1} parent=5 // pred_check
        %p133 = pneg %p132
      $region14: #{tpu_custom_call.1} parent=5 // pred_check_branch
        %135 = sbr.rel (%p133) target = $region16
      $region15: #{tpu_custom_call.1} parent=5 // pred_region
        // Predicated region
        $region17: #{tpu_custom_call.1} parent=15 // pred_check
          %p136 = pneg %p55
        $region18: #{tpu_custom_call.1} parent=15 // pred_check_branch
          %138 = sbr.rel (%p136) target = $region20
        $region19: #{tpu_custom_call.1} parent=15 // pred_region
          %s139 = sand.u32 %s45, 1
          %s140 = scalar_lea.sflag [#allocation3], %s139
          %s141 = sand.u32 %s45, 1
          %s142 = smul.addr %s141, 64
          %s143 = scalar_lea.vmem [#allocation2], %s142
          %s144 = sadd.s32 %s20, %s21
          %s145 = smul.u32 2, %s144
          %s147 = ssub.s32 1024, 1024
          %148 = vsyncadd %s140, %s147
          %s149 = smul.addr %s19, 8
          %s150 = sadd.s32 %s145, %s149
          %s151 = smul.addr %s150, 128
          %s152 = scalar_lea.hbm %s0, %s151
          %s153 = sshll.u32 %s143, 4
          %s154 = int_to_ptr.vmem [resolvable:$true] %s153
          %159 = dma.hbm_to_vmem [thread:$0]  %s152, 1024, %s154, %s140, 256, 256, 16
        $region20: #{tpu_custom_call.1} parent=15 // pred_fallthru
          _
      $region16: #{tpu_custom_call.1} parent=5 // pred_fallthru
        _
      %p160 = scmp.le.s32.totalorder 1, %s12
      %p161 = scmp.lt.s32.totalorder %s12, 3
      %p162 = pnand %p160, %p161
      %p163 = pneg %p162
      // Predicated region
      $region21: #{tpu_custom_call.1} parent=5 // pred_check
        _
      $region22: #{tpu_custom_call.1} parent=5 // pred_check_branch
        %165 = sbr.rel (%p162) target = $region24
      $region23: #{tpu_custom_call.1} parent=5 // pred_region
        %s166 = ssub.s32 %s12, 1
        %s167 = sand.u32 %s48, 1
        %s168 = scalar_lea.sflag [#allocation3], %s167
        %s169 = sand.u32 %s48, 1
        %s170 = smul.addr %s169, 64
        %s171 = scalar_lea.vmem [#allocation2], %s170
        // Predicated region
        $region25: #{tpu_custom_call.1} parent=23 // pred_check
          %p172 = pneg %p61
        $region26: #{tpu_custom_call.1} parent=23 // pred_check_branch
          %174 = sbr.rel (%p172) target = $region28
        $region27: #{tpu_custom_call.1} parent=23 // pred_region
          %175 = dma.done %s168, 1024
        $region28: #{tpu_custom_call.1} parent=23 // pred_fallthru
          _
        %s176 = sand.u32 %s48, 1
        %s177 = scalar_lea.sflag [#allocation3], %s176
        %s178 = sand.u32 %s48, 1
        %s179 = smul.addr %s178, 64
        %s180 = scalar_lea.vmem [#allocation2], %s179
        %p181 = pneg %p61
        %p182 = pneg %p58
        %p183 = pneg %p89
        %p184 = pneg %p86
        %p185 = scmp.lt.s32.totalorder %s22, 1
        %s186 = scalar_select %p185, %s22, 1
        %p187 = scmp.lt.s32.totalorder %s23, 0
        %s188 = scalar_select %p187, %s23, 0
        %s189 = smul.addr %s188, 4
        %s190 = smul.addr %s186, 4
        %s191 = sadd.s32 %s189, %s190
        %s192 = smul.addr %s191, 8
        %s193 = scalar_lea.vmem %s1, %s192
        %p194 = pneg %p117
        %p195 = pneg %p114
        %p196 = scmp.lt.s32.totalorder %s22, 1
        %s197 = scalar_select %p196, %s22, 1
        %p198 = scmp.lt.s32.totalorder %s23, 0
        %s199 = scalar_select %p198, %s23, 0
        %s200 = smul.addr %s199, 4
        %s201 = smul.addr %s197, 4
        %s202 = sadd.s32 %s200, %s201
        %s203 = smul.addr %s202, 8
        %s204 = scalar_lea.vmem %s2, %s203
        %s205 = sadd.s32 %s23, %s24
        %s206 = smul.u32 2, %s205
        %p207 = scmp.lt.s32.totalorder %s22, 1
        %s208 = scalar_select %p207, %s22, 1
        %p209 = scmp.lt.s32.totalorder %s23, 0
        %s210 = scalar_select %p209, %s23, 0
        %s211 = smul.addr %s210, 4
        %s212 = smul.addr %s208, 4
        %s213 = sadd.s32 %s211, %s212
        %s214 = smul.addr %s213, 8
        %s215 = scalar_lea.vmem %s1, %s214
        %p216 = scmp.lt.s32.totalorder %s22, 1
        %s217 = scalar_select %p216, %s22, 1
        %p218 = scmp.lt.s32.totalorder %s23, 0
        %s219 = scalar_select %p218, %s23, 0
        %s220 = smul.addr %s219, 4
        %s221 = smul.addr %s217, 4
        %s222 = sadd.s32 %s220, %s221
        %s223 = smul.addr %s222, 8
        %s224 = scalar_lea.vmem %s2, %s223
        %p225 = scmp.eq.s32.totalorder %s24, 0
        // Predicated region
        $region29: #{tpu_custom_call.1} parent=23 // pred_check
          %p226 = pneg %p225
        $region30: #{tpu_custom_call.1} parent=23 // pred_check_branch
          %228 = sbr.rel (%p226) target = $region32
        $region31: #{tpu_custom_call.1} parent=23 // pred_region
          %vm229 = vcmask 7168
          %230 = vst.msk [vmem:[%s215] sm:$0xff] %vm229, 0.0
          %231 = vst.msk [vmem:[%s215 + $0x8] sm:$0xff] %vm229, 0.0
          %232 = vst.msk [vmem:[%s215 + $0x10] sm:$0xff] %vm229, 0.0
          %233 = vst.msk [vmem:[%s215 + $0x18] sm:$0xff] %vm229, 0.0
          %234 = vst.msk [vmem:[%s224] sm:$0xff] %vm229, 0.0
          %235 = vst.msk [vmem:[%s224 + $0x8] sm:$0xff] %vm229, 0.0
          %236 = vst.msk [vmem:[%s224 + $0x10] sm:$0xff] %vm229, 0.0
          %237 = vst.msk [vmem:[%s224 + $0x18] sm:$0xff] %vm229, 0.0
        $region32: #{tpu_custom_call.1} parent=23 // pred_fallthru
          _
        %v238 = vld [vmem:[%s171] sm:$0xff]
        %v239 = vld [vmem:[%s171 + $0x8] sm:$0xff]
        %v240 = vld [vmem:[%s171 + $0x10] sm:$0xff]
        %v241 = vld [vmem:[%s171 + $0x18] sm:$0xff]
        %v242 = vld [vmem:[%s171 + $0x20] sm:$0xff]
        %v243 = vld [vmem:[%s171 + $0x28] sm:$0xff]
        %v244 = vld [vmem:[%s171 + $0x30] sm:$0xff]
        %v245 = vld [vmem:[%s171 + $0x38] sm:$0xff]
        %v246 = vld [vmem:[%s215] sm:$0xff]
        %v247 = vld [vmem:[%s215 + $0x8] sm:$0xff]
        %v248 = vld [vmem:[%s215 + $0x10] sm:$0xff]
        %v249 = vld [vmem:[%s215 + $0x18] sm:$0xff]
        %v250 = vadd.f32 %v238, %v239
        %251 = vadd.xlane.f32.xlu0 %v250
        %v252 = vpop.xlane.xlu0 %251
        %v253 = vadd.f32 %v240, %v241
        %254 = vadd.xlane.f32.xlu0 %v253
        %v255 = vpop.xlane.xlu0 %254
        %v256 = vadd.f32 %v242, %v243
        %257 = vadd.xlane.f32.xlu0 %v256
        %v258 = vpop.xlane.xlu0 %257
        %v259 = vadd.f32 %v244, %v245
        %260 = vadd.xlane.f32.xlu0 %v259
        %v261 = vpop.xlane.xlu0 %260
        %v262 = vadd.f32 %v246, %v252
        %v263 = vadd.f32 %v247, %v255
        %v264 = vadd.f32 %v248, %v258
        %v265 = vadd.f32 %v249, %v261
        %vm266 = vcmask 7168
        %267 = vst.msk [vmem:[%s215] sm:$0xff] %vm266, %v262
        %268 = vst.msk [vmem:[%s215 + $0x8] sm:$0xff] %vm266, %v263
        %269 = vst.msk [vmem:[%s215 + $0x10] sm:$0xff] %vm266, %v264
        %270 = vst.msk [vmem:[%s215 + $0x18] sm:$0xff] %vm266, %v265
        %v271 = vld [vmem:[%s224] sm:$0xff]
        %v272 = vld [vmem:[%s224 + $0x8] sm:$0xff]
        %v273 = vld [vmem:[%s224 + $0x10] sm:$0xff]
        %v274 = vld [vmem:[%s224 + $0x18] sm:$0xff]
        %v275 = vmul.f32 %v238, %v238
        %v276 = vmul.f32 %v239, %v239
        %v277 = vmul.f32 %v240, %v240
        %v278 = vmul.f32 %v241, %v241
        %v279 = vmul.f32 %v242, %v242
        %v280 = vmul.f32 %v243, %v243
        %v281 = vmul.f32 %v244, %v244
        %v282 = vmul.f32 %v245, %v245
        %v283 = vadd.f32 %v275, %v276
        %284 = vadd.xlane.f32.xlu0 %v283
        %v285 = vpop.xlane.xlu0 %284
        %v286 = vadd.f32 %v277, %v278
        %287 = vadd.xlane.f32.xlu0 %v286
        %v288 = vpop.xlane.xlu0 %287
        %v289 = vadd.f32 %v279, %v280
        %290 = vadd.xlane.f32.xlu0 %v289
        %v291 = vpop.xlane.xlu0 %290
        %v292 = vadd.f32 %v281, %v282
        %293 = vadd.xlane.f32.xlu0 %v292
        %v294 = vpop.xlane.xlu0 %293
        %v295 = vadd.f32 %v271, %v285
        %v296 = vadd.f32 %v272, %v288
        %v297 = vadd.f32 %v273, %v291
        %v298 = vadd.f32 %v274, %v294
        %299 = vst.msk [vmem:[%s224] sm:$0xff] %vm266, %v295
        %300 = vst.msk [vmem:[%s224 + $0x8] sm:$0xff] %vm266, %v296
        %301 = vst.msk [vmem:[%s224 + $0x10] sm:$0xff] %vm266, %v297
        %302 = vst.msk [vmem:[%s224 + $0x18] sm:$0xff] %vm266, %v298
        %p303 = scmp.lt.s32.totalorder %s22, 1
        %s304 = scalar_select %p303, %s22, 1
        %p305 = scmp.lt.s32.totalorder %s23, 0
        %s306 = scalar_select %p305, %s23, 0
        %s307 = smul.addr %s306, 4
        %s308 = smul.addr %s304, 4
        %s309 = sadd.s32 %s307, %s308
        %s310 = smul.addr %s309, 8
        %s311 = scalar_lea.vmem %s1, %s310
        %p312 = scmp.lt.s32.totalorder %s22, 1
        %s313 = scalar_select %p312, %s22, 1
        %p314 = scmp.lt.s32.totalorder %s23, 0
        %s315 = scalar_select %p314, %s23, 0
        %s316 = smul.addr %s315, 4
        %s317 = smul.addr %s313, 4
        %s318 = sadd.s32 %s316, %s317
        %s319 = smul.addr %s318, 8
        %s320 = scalar_lea.vmem %s2, %s319
        // Predicated region
        $region33: #{tpu_custom_call.1} parent=23 // pred_check
          %p321 = pneg %p86
        $region34: #{tpu_custom_call.1} parent=23 // pred_check_branch
          %323 = sbr.rel (%p321) target = $region36
        $region35: #{tpu_custom_call.1} parent=23 // pred_region
          _
        $region36: #{tpu_custom_call.1} parent=23 // pred_fallthru
          _
        // Predicated region
        $region37: #{tpu_custom_call.1} parent=23 // pred_check
          %p324 = pneg %p114
        $region38: #{tpu_custom_call.1} parent=23 // pred_check_branch
          %326 = sbr.rel (%p324) target = $region40
        $region39: #{tpu_custom_call.1} parent=23 // pred_region
          _
        $region40: #{tpu_custom_call.1} parent=23 // pred_fallthru
          _
      $region24: #{tpu_custom_call.1} parent=5 // pred_fallthru
        _
      %p327 = scmp.le.s32.totalorder 2, %s12
      // Predicated region
      $region41: #{tpu_custom_call.1} parent=5 // pred_check
        %p328 = pneg %p327
      $region42: #{tpu_custom_call.1} parent=5 // pred_check_branch
        %330 = sbr.rel (%p328) target = $region44
      $region43: #{tpu_custom_call.1} parent=5 // pred_region
        %s331 = ssub.s32 %s12, 2
        // Predicated region
        $region45: #{tpu_custom_call.1} parent=43 // pred_check
          %p332 = pneg %p92
        $region46: #{tpu_custom_call.1} parent=43 // pred_check_branch
          %334 = sbr.rel (%p332) target = $region48
        $region47: #{tpu_custom_call.1} parent=43 // pred_region
          %p335 = scmp.lt.s32.totalorder %s25, 1
          %s336 = scalar_select %p335, %s25, 1
          %p337 = scmp.lt.s32.totalorder %s26, 0
          %s338 = scalar_select %p337, %s26, 0
          %s339 = smul.addr %s338, 4
          %s340 = smul.addr %s336, 4
          %s341 = sadd.s32 %s339, %s340
          %s342 = smul.addr %s341, 8
          %s343 = scalar_lea.vmem %s1, %s342
        $region48: #{tpu_custom_call.1} parent=43 // pred_fallthru
          _
        // Predicated region
        $region49: #{tpu_custom_call.1} parent=43 // pred_check
          %p344 = pneg %p120
        $region50: #{tpu_custom_call.1} parent=43 // pred_check_branch
          %346 = sbr.rel (%p344) target = $region52
        $region51: #{tpu_custom_call.1} parent=43 // pred_region
          %p347 = scmp.lt.s32.totalorder %s25, 1
          %s348 = scalar_select %p347, %s25, 1
          %p349 = scmp.lt.s32.totalorder %s26, 0
          %s350 = scalar_select %p349, %s26, 0
          %s351 = smul.addr %s350, 4
          %s352 = smul.addr %s348, 4
          %s353 = sadd.s32 %s351, %s352
          %s354 = smul.addr %s353, 8
          %s355 = scalar_lea.vmem %s2, %s354
        $region52: #{tpu_custom_call.1} parent=43 // pred_fallthru
          _
      $region44: #{tpu_custom_call.1} parent=5 // pred_fallthru
        _
    $region6: #{tpu_custom_call.1} parent=1 // loop_footer
      %s16 = sadd.s32 1, %s12
    $region7: #{tpu_custom_call.1} parent=1 // loop_footer_branch
      %11 = sbr.rel target = $region3
    $region8: #{tpu_custom_call.1} parent=1 // loop_exit
      _
    %356 = vsyncpa [#allocation3], 1
    %s357 = scalar_lea.sflag [#allocation3], 1
    %358 = vsyncpa %s357, 1

</llo_original>
